<compile_context>
chip_gen: v7x
topology: tpu7x:2x2x1
jax: 0.10.0
libtpu: 0.0.40
codegen_flags: <defaults>
</compile_context>

<pallas_src>
import functools

import jax
import jax.numpy as jnp
from jax import lax
from jax.experimental import pallas as pl
from jax.experimental.pallas import tpu as pltpu

# Problem sizes for the module (n / n_features / n_classes).
N = 8
N_FEATURES = 128
N_CLASSES = 128
MULTI_OUT = False


def linear_kernel(x_ref, w_ref, b_ref, o_ref):
    # x_ref: (N, F) bf16, w_ref: (F, C) bf16 (pre-transposed), b_ref: (1, C) f32
    # Single MXU matmul with f32 accumulation; bias broadcast-add on the VPU.
    acc = lax.dot_general(
        x_ref[...],
        w_ref[...],
        dimension_numbers=(((1,), (0,)), ((), ())),
        preferred_element_type=jnp.float32,
    )
    o_ref[...] = acc + b_ref[...]  # output is f32; no cast needed


@functools.partial(jax.jit, static_argnames=("multi_out",))
def my_model_forward(x, weight, bias, multi_out: bool = MULTI_OUT):
    """Pallas equivalent of MyModel.forward.

    x:      (N, F) float32
    weight: (C, F) float32  -- PyTorch nn.Linear weight layout
    bias:   (C,)   float32
    """
    n, f = x.shape
    c = weight.shape[0]

    # One-time (per jit trace / per call, amortized) operand prep:
    #  - bf16 operands for the MXU, f32 accumulate in-kernel
    #  - weight transposed to (F, C) so the kernel does a plain NN contraction
    x_bf16 = x.astype(jnp.bfloat16)
    w_fc = weight.T.astype(jnp.bfloat16)          # (F, C)
    b2d = bias.reshape(1, c)                       # f32, metadata-only reshape

    vmem_spec = pl.BlockSpec(memory_space=pltpu.MemorySpace.VMEM)

    bytes_accessed = (
        n * f * 2          # x  bf16
        + f * c * 2        # w  bf16
        + c * 4            # bias f32
        + n * c * 4        # out f32
    )

    out = pl.pallas_call(
        linear_kernel,
        out_shape=jax.ShapeDtypeStruct((n, c), jnp.float32),
        in_specs=[vmem_spec, vmem_spec, vmem_spec],
        out_specs=vmem_spec,
        cost_estimate=pl.CostEstimate(
            flops=2 * n * f * c,
            bytes_accessed=bytes_accessed,
            transcendentals=0,
        ),
    )(x_bf16, w_fc, b2d)

    # TODO(synk): for large N/F/C, switch to a gridded K-last reduction with
    # 256-multiple output tiles (v6e/v7x MXU), mark the batch axis "parallel"
    # (v7x 2 TensorCores), and set vmem_limit_bytes to stay under v7x's 64 MiB.
    if not multi_out:
        return out
    else:
        return (out, out)


if __name__ == "__main__":
    key = jax.random.PRNGKey(0)
    kx, kw, kb = jax.random.split(key, 3)

    # Deterministic synthetic inputs; shapes from nn.Linear(n_features, n_classes).
    x = jax.random.normal(kx, (N, N_FEATURES), dtype=jnp.float32)
    weight = jax.random.normal(kw, (N_CLASSES, N_FEATURES), dtype=jnp.float32) * 0.1
    bias = jax.random.normal(kb, (N_CLASSES,), dtype=jnp.float32) * 0.1

    out = my_model_forward(x, weight, bias, multi_out=MULTI_OUT)
    out = jax.block_until_ready(out)

    # Correctness check against plain-JAX f32 reference of the PyTorch forward.
    # Tolerance relaxed because operands go through bf16 (accumulation is f32).
    ref = x @ weight.T + bias
    assert out.shape == (N, N_CLASSES)
    assert jnp.allclose(out, ref, atol=5e-2, rtol=2e-2)

    print("KERNEL_OK")
</pallas_src>

<mosaic_0001>
module attributes {stable_mosaic.version = 11 : i64} {
  func.func @linear_kernel(%arg0: memref<8x128xbf16, #tpu.memory_space<vmem>>, %arg1: memref<128x128xbf16, #tpu.memory_space<vmem>>, %arg2: memref<1x128xf32, #tpu.memory_space<vmem>>, %arg3: memref<8x128xf32, #tpu.memory_space<vmem>>) attributes {dimension_semantics = [], scalar_prefetch = 0 : i64, scratch_operands = 0 : i64, tpu.core_type = #tpu.core_type<tc>} {
    %c0 = arith.constant 0 : index
    %c0_0 = arith.constant 0 : index
    %0 = vector.load %arg0[%c0, %c0_0] : memref<8x128xbf16, #tpu.memory_space<vmem>>, vector<8x128xbf16>
    %c0_1 = arith.constant 0 : index
    %c0_2 = arith.constant 0 : index
    %1 = vector.load %arg1[%c0_1, %c0_2] : memref<128x128xbf16, #tpu.memory_space<vmem>>, vector<128x128xbf16>
    %cst = arith.constant dense<0.000000e+00> : vector<8x128xf32>
    %2 = tpu.matmul %0, %1, %cst {dimension_numbers = #tpu.dot_dimension_numbers<[1], [0], [0], [1], [0, 0, 1, 1], [], []>} : vector<8x128xbf16>, vector<128x128xbf16>, vector<8x128xf32> -> vector<8x128xf32>
    %c0_3 = arith.constant 0 : index
    %c0_4 = arith.constant 0 : index
    %3 = vector.load %arg2[%c0_3, %c0_4] : memref<1x128xf32, #tpu.memory_space<vmem>>, vector<1x128xf32>
    %4 = vector.broadcast %3 : vector<1x128xf32> to vector<8x128xf32>
    %5 = arith.addf %2, %4 : vector<8x128xf32>
    %c0_5 = arith.constant 0 : index
    %c0_6 = arith.constant 0 : index
    %6 = vector.load %arg3[%c0_5, %c0_6] : memref<8x128xf32, #tpu.memory_space<vmem>>, vector<8x128xf32>
    tpu.vector_store %arg3[%c0_5, %c0_6], %5 {strides = array<i32>} : memref<8x128xf32, #tpu.memory_space<vmem>>, vector<8x128xf32>,
    return
  }
}

</mosaic_0001>

<llo_original>
// kernel: my_model_forward.1
$region0: #{my_model_forward.1}
  #allocation0 [shape = 'u32[]', space=smem, size = 0x4, offset = 0x4, fixed_abs, tag = 'smem constant byte address 0x4 - core index']
  #allocation1 [shape = 'u32[144,128]{1,0:T(1,128)}', space=vmem, size = 0x12000, scoped, tag = 'internal scratch']
  %s0 = inlined_call_operand.vmem [shape: bf16[8,128], index: 0, kind: input, shape index: {}]
  %s1 = inlined_call_operand.vmem [shape: bf16[128,128], index: 1, kind: input, shape index: {}]
  %s2 = inlined_call_operand.vmem [shape: f32[1,128], index: 2, kind: input, shape index: {}]
  %s3 = inlined_call_operand.hbm [shape: f32[8,128], index: 3, kind: output, shape index: {}]
  %s4 = sld [smem:[#allocation0]]
  $region22: #{my_model_forward.1} parent=0
    _
  %s6 = ssub.s32 1, %s4
  %s7 = scalar_select 0, %s6, %s4
  $region1: #{my_model_forward.1} parent=0
    #allocation2 [shape = 'u8[4096]{0}', space=vmem, size = 0x1000, scoped, tag = 'output window, operand 0, single buffered']
    #allocation3 [shape = 's32[1]{0}', space=sflag, size = 0x4, scoped, tag = 'scoped memory for my_model_forward.1']
    %8 = vsyncpa [#allocation3], 0
    // Predicated region
    $region2: #{my_model_forward.1} parent=1 // pred_check
      _
    $region3: #{my_model_forward.1} parent=1 // pred_check_branch
      %10 = sbr.rel (0) target = $region5
    $region4: #{my_model_forward.1} parent=1 // pred_region
      _
    $region5: #{my_model_forward.1} parent=1 // pred_fallthru
      _
    // Predicated region
    $region6: #{my_model_forward.1} parent=1 // pred_check
      _
    $region7: #{my_model_forward.1} parent=1 // pred_check_branch
      %12 = sbr.rel (0) target = $region9
    $region8: #{my_model_forward.1} parent=1 // pred_region
      _
    $region9: #{my_model_forward.1} parent=1 // pred_fallthru
      _
    // Predicated region
    $region10: #{my_model_forward.1} parent=1 // pred_check
      _
    $region11: #{my_model_forward.1} parent=1 // pred_check_branch
      %14 = sbr.rel (0) target = $region13
    $region12: #{my_model_forward.1} parent=1 // pred_region
      _
    $region13: #{my_model_forward.1} parent=1 // pred_fallthru
      _
    %v16 = vld [vmem:[%s0] sm:$0xf]
    %v17 = vld [vmem:[%s1] sm:$0xf]
    %v18 = vld [vmem:[%s1 + $0x4] sm:$0xf]
    %v19 = vld [vmem:[%s1 + $0x8] sm:$0xf]
    %v20 = vld [vmem:[%s1 + $0xc] sm:$0xf]
    %v21 = vld [vmem:[%s1 + $0x10] sm:$0xf]
    %v22 = vld [vmem:[%s1 + $0x14] sm:$0xf]
    %v23 = vld [vmem:[%s1 + $0x18] sm:$0xf]
    %v24 = vld [vmem:[%s1 + $0x1c] sm:$0xf]
    %v25 = vld [vmem:[%s1 + $0x20] sm:$0xf]
    %v26 = vld [vmem:[%s1 + $0x24] sm:$0xf]
    %v27 = vld [vmem:[%s1 + $0x28] sm:$0xf]
    %v28 = vld [vmem:[%s1 + $0x2c] sm:$0xf]
    %v29 = vld [vmem:[%s1 + $0x30] sm:$0xf]
    %v30 = vld [vmem:[%s1 + $0x34] sm:$0xf]
    %v31 = vld [vmem:[%s1 + $0x38] sm:$0xf]
    %v32 = vld [vmem:[%s1 + $0x3c] sm:$0xf]
    %v33 = vld [vmem:[%s2] sm:$0x1]
    %v35 = vlaneseq
    %v36 = vshrl.u32 %v35, 7
    %v37 = vsub.s32 0, %v36
    %v38 = vrot.slane %v33, %v37
    %v56 = vunpack.c.l.b16 %v17
    %v57 = vunpack.c.l.b16 %v18
    %v58 = vunpack.c.l.b16 %v19
    %v59 = vunpack.c.l.b16 %v20
    %v60 = vunpack.c.l.b16 %v21
    %v61 = vunpack.c.l.b16 %v22
    %v62 = vunpack.c.l.b16 %v23
    %v63 = vunpack.c.l.b16 %v24
    %v64 = vunpack.c.l.b16 %v25
    %v65 = vunpack.c.l.b16 %v26
    %v66 = vunpack.c.l.b16 %v27
    %v67 = vunpack.c.l.b16 %v28
    %v68 = vunpack.c.l.b16 %v29
    %v69 = vunpack.c.l.b16 %v30
    %v70 = vunpack.c.l.b16 %v31
    %v71 = vunpack.c.l.b16 %v32
    %v72 = vpack.c.b16 %v57, %v56
    %v73 = vpack.c.b16 %v59, %v58
    %v74 = vpack.c.b16 %v61, %v60
    %v75 = vpack.c.b16 %v63, %v62
    %v76 = vpack.c.b16 %v65, %v64
    %v77 = vpack.c.b16 %v67, %v66
    %v78 = vpack.c.b16 %v69, %v68
    %v79 = vpack.c.b16 %v71, %v70
    %88 = vmatprep.subr.bf16.mxu0 0
    %89 = vmatpush1.bf16.msra.mxu0 %v72
    %90 = vmatprep.subr.bf16.mxu0 0
    %91 = vmatpush1.bf16.msra.mxu0 %v73
    %92 = vmatprep.subr.bf16.mxu0 0
    %93 = vmatpush1.bf16.msra.mxu0 %v74
    %94 = vmatprep.subr.bf16.mxu0 0
    %95 = vmatpush1.bf16.msra.mxu0 %v75
    %96 = vmatprep.subr.bf16.mxu0 0
    %97 = vmatpush1.bf16.msra.mxu0 %v76
    %98 = vmatprep.subr.bf16.mxu0 0
    %99 = vmatpush1.bf16.msra.mxu0 %v77
    %100 = vmatprep.subr.bf16.mxu0 0
    %101 = vmatpush1.bf16.msra.mxu0 %v78
    %102 = vmatprep.subr.bf16.mxu0 0
    %103 = vmatpush1.bf16.msra.mxu0 %v79
    %104 = vmatprep.subr.bf16.mxu0 0
    %105 = vmatpush1.bf16.msra.mxu0 0
    %106 = vmatprep.subr.bf16.mxu0 0
    %107 = vmatpush1.bf16.msra.mxu0 0
    %108 = vmatprep.subr.bf16.mxu0 0
    %109 = vmatpush1.bf16.msra.mxu0 0
    %110 = vmatprep.subr.bf16.mxu0 0
    %111 = vmatpush1.bf16.msra.mxu0 0
    %112 = vmatprep.subr.bf16.mxu0 0
    %113 = vmatpush1.bf16.msra.mxu0 0
    %114 = vmatprep.subr.bf16.mxu0 0
    %115 = vmatpush1.bf16.msra.mxu0 0
    %116 = vmatprep.subr.bf16.mxu0 0
    %117 = vmatpush1.bf16.msra.mxu0 0
    %118 = vmatprep.subr.bf16.mxu0 0
    %119 = vmatpush1.bf16.msra.mxu0 0
    %120 = vmatprep.mubr.bf16.mxu0 0
    %121 = vmatmul.mubr.bf16.gmra.mrb[0].mxu0 %v16
    %v122 = vpop.f32.mrb[0].mxu0
    %v123 = vadd.f32 %v38, %v122
    %v124 = vpop.f32.mrb[0].mxu0
    %v125 = vpop.f32.mrb[0].mxu0
    %v126 = vpop.f32.mrb[0].mxu0
    %127 = vdwg.mxu0
    %128 = vst [vmem:[#allocation2] sm:$0xff] %v123
    // Predicated region
    $region14: #{my_model_forward.1} parent=1 // pred_check
      _
    $region15: #{my_model_forward.1} parent=1 // pred_check_branch
      %130 = sbr.rel (0) target = $region17
    $region16: #{my_model_forward.1} parent=1 // pred_region
      %s132 = ssub.s32 128, 128
      %133 = vsyncadd [#allocation3], %s132
      %s135 = sshll.u32 [#allocation2], 4
      %s136 = int_to_ptr.vmem [resolvable:$true] %s135
      %138 = dma.vmem_to_hbm [thread:$0]  %s136, 128, %s3, [#allocation3]
    $region17: #{my_model_forward.1} parent=1 // pred_fallthru
      _
    // Predicated region
    $region18: #{my_model_forward.1} parent=1 // pred_check
      _
    $region19: #{my_model_forward.1} parent=1 // pred_check_branch
      %140 = sbr.rel (0) target = $region21
    $region20: #{my_model_forward.1} parent=1 // pred_region
      %141 = dma.done [#allocation3], 128
    $region21: #{my_model_forward.1} parent=1 // pred_fallthru
      _
    %142 = vsyncpa [#allocation3], 1

</llo_original>
